<compile_context>
chip_gen: v7x
topology: tpu7x:2x2x1
jax: 0.10.0
libtpu: 0.0.40
codegen_flags: <defaults>
</compile_context>

<pallas_src>
import functools

import jax
import jax.numpy as jnp
import numpy as np
from jax import lax
from jax.experimental import pallas as pl
from jax.experimental.pallas import tpu as pltpu


def _round_up(x, m):
    return ((x + m - 1) // m) * m


def _biaffine_kernel(x_ref, y_ref, wm_ref, waux_ref, corner_ref, o_ref, *,
                     bias_x, bias_y):
    # x_ref:    (tb, tlx, K)          compute dtype
    # y_ref:    (tb, Lyp, K)          compute dtype
    # wm_ref:   (1, K, K)             compute dtype   W[o, :n_in, :n_in] (padded)
    # waux_ref: (1, 2, K)  f32        row 0 = bias_x row, row 1 = bias_y col
    # corner_ref: SMEM (n_out,) f32   W[o, n_in, n_in] (0 if unused)
    # o_ref:    (tb, 1, tlx, Lyp)     f32
    tb, tlx, k = x_ref.shape
    lyp = y_ref.shape[1]
    o = pl.program_id(2)

    # ---- first contraction (MXU): t = x @ W_main ---------------------------
    # K is a multiple of 128 so the (tb, tlx, K) -> (tb*tlx, K) flatten is free.
    x2d = x_ref[...].reshape(tb * tlx, k)
    t = jnp.dot(x2d, wm_ref[0], preferred_element_type=jnp.float32)  # (tb*tlx, K) f32
    if bias_x:
        # implicit ones appended to x select row n_in of W -> broadcast row add
        t = t + waux_ref[0, 0:1, :].astype(jnp.float32)

    # ---- second contraction (MXU, batched over tb): s = t @ y^T ------------
    # Both operands contract their lane (last) dim -> layout friendly.
    t3 = t.reshape(tb, tlx, k).astype(x_ref.dtype)
    s = lax.dot_general(
        t3, y_ref[...],
        dimension_numbers=(((2,), (2,)), ((0,), (0,))),
        preferred_element_type=jnp.float32)                          # (tb, tlx, Lyp)

    if bias_y:
        # implicit ones appended to y select column n_in of W:
        #   c[b, i] = x[b, i, :] . w_by_col (+ corner)   (VPU mul + lane reduce)
        wby = waux_ref[0, 1:2, :].astype(jnp.float32)                # (1, K)
        c = jnp.sum(x_ref[...].astype(jnp.float32) * wby[None, :, :],
                    axis=-1, keepdims=True)                          # (tb, tlx, 1)
        s = s + (c + corner_ref[o])

    o_ref[...] = s.reshape(tb, 1, tlx, lyp).astype(o_ref.dtype)


def biaffine(x, y, weight, *, bias_x=True, bias_y=True,
             batch_tile=None, lx_tile=256, compute_dtype=jnp.float32):
    """Biaffine.forward(x, y) -> (B, Lx, Ly, n_out).

    x: (B, Lx, n_in), y: (B, Ly, n_in),
    weight: (n_out, n_in + bias_x, n_in + bias_y)  (same layout as torch).
    """
    B, Lx, n_in = x.shape
    By, Ly, n_in_y = y.shape
    assert By == B and n_in_y == n_in
    n_out, Dx, Dy = weight.shape
    assert Dx == n_in + int(bias_x) and Dy == n_in + int(bias_y)

    # ---- tile / padding plan ------------------------------------------------
    K = _round_up(n_in, 128)        # feature dim (lane dim of first matmul)
    Lyp = _round_up(Ly, 128)        # output lane dim -> unmasked vst
    Lx8 = _round_up(Lx, 8)
    tlx = min(_round_up(max(lx_tile, 8), 8), Lx8)   # Lx tile (mult of 8)
    Lxp = _round_up(Lx8, tlx)

    if batch_tile is None:
        batch_tile = max(d for d in range(1, min(B, 8) + 1) if B % d == 0)
    tb = batch_tile
    assert B % tb == 0, "batch_tile must divide the batch size"

    # ---- split & pad the weight (bias row/col/corner pulled out) ------------
    w = weight.astype(jnp.float32)
    w_main = jnp.pad(w[:, :n_in, :n_in],
                     ((0, 0), (0, K - n_in), (0, K - n_in)))
    w_bx = jnp.zeros((n_out, K), jnp.float32)
    w_by = jnp.zeros((n_out, K), jnp.float32)
    corner = jnp.zeros((n_out,), jnp.float32)
    if bias_x:
        w_bx = jnp.pad(w[:, n_in, :n_in], ((0, 0), (0, K - n_in)))
    if bias_y:
        w_by = jnp.pad(w[:, :n_in, n_in], ((0, 0), (0, K - n_in)))
    if bias_x and bias_y:
        corner = w[:, n_in, n_in]
    w_aux = jnp.stack([w_bx, w_by], axis=1)            # (n_out, 2, K), kept f32

    # ---- pad & cast activations ---------------------------------------------
    cd = jnp.dtype(compute_dtype)
    x_p = jnp.pad(x.astype(cd), ((0, 0), (0, Lxp - Lx), (0, K - n_in)))
    y_p = jnp.pad(y.astype(cd), ((0, 0), (0, Lyp - Ly), (0, K - n_in)))
    w_main = w_main.astype(cd)

    grid = (B // tb, Lxp // tlx, n_out)

    # ---- explicit VMEM budget (double-buffered blocks + hidden temporaries) --
    in_b = cd.itemsize
    x_blk = tb * tlx * K * in_b
    y_blk = tb * Lyp * K * in_b
    wm_blk = K * K * in_b
    waux_blk = 8 * K * 4
    out_blk = tb * tlx * Lyp * 4
    tmp = tb * tlx * K * 4 + tb * tlx * Lyp * 4        # t and s temporaries
    budget = 2 * (x_blk + y_blk + wm_blk + waux_blk + out_blk) + tmp
    vmem_limit = int(min(max(budget + budget // 4 + (2 << 20), 16 << 20), 64 << 20))

    kernel = functools.partial(_biaffine_kernel, bias_x=bias_x, bias_y=bias_y)

    s = pl.pallas_call(
        kernel,
        out_shape=jax.ShapeDtypeStruct((B, n_out, Lxp, Lyp), jnp.float32),
        grid_spec=pltpu.PrefetchScalarGridSpec(
            num_scalar_prefetch=0,
            grid=grid,
            in_specs=[
                pl.BlockSpec((tb, tlx, K), lambda b, l, o: (b, l, 0)),   # x tile
                pl.BlockSpec((tb, Lyp, K), lambda b, l, o: (b, 0, 0)),   # y (full Ly)
                pl.BlockSpec((1, K, K), lambda b, l, o: (o, 0, 0)),      # W_main[o]
                pl.BlockSpec((1, 2, K), lambda b, l, o: (o, 0, 0)),      # bias row/col
                pl.BlockSpec(memory_space=pltpu.MemorySpace.SMEM),       # corner[:]
            ],
            out_specs=pl.BlockSpec((tb, 1, tlx, Lyp),
                                   lambda b, l, o: (b, o, l, 0)),
        ),
        compiler_params=pltpu.CompilerParams(
            dimension_semantics=("parallel", "parallel", "arbitrary"),
            vmem_limit_bytes=vmem_limit),
    )(x_p, y_p, w_main, w_aux, corner)

    if Lxp != Lx or Lyp != Ly:
        s = s[:, :, :Lx, :Ly]
    if n_out == 1:
        # (B, 1, Lx, Ly) -> (B, Lx, Ly, 1): layout-trivial, no extra HBM pass.
        return s.reshape(B, Lx, Ly, 1)
    # 'b o x y' -> 'b x y o' (the PyTorch s.permute(0, 2, 3, 1))
    return jnp.transpose(s, (0, 2, 3, 1))


# ---------------- pure-JAX reference (mirrors the PyTorch forward) -----------
def _biaffine_ref(x, y, weight, bias_x=True, bias_y=True):
    if bias_x:
        x = jnp.concatenate([x, jnp.ones_like(x[..., :1])], axis=-1)
    if bias_y:
        y = jnp.concatenate([y, jnp.ones_like(y[..., :1])], axis=-1)
    s = jnp.einsum('bxi,oij,byj->boxy', x, weight, y)
    return jnp.transpose(s, (0, 2, 3, 1))


if __name__ == "__main__":
    key = jax.random.PRNGKey(0)
    B, L, n_in, n_out = 2, 8, 32, 2
    kx, ky, kw = jax.random.split(key, 3)

    x = jax.random.normal(kx, (B, L, n_in), jnp.float32)
    y = jax.random.normal(ky, (B, L, n_in), jnp.float32)

    # xavier_normal_-style init of the (n_out, n_in+1, n_in+1) biaffine weight
    fan = n_in + 1
    std = float(np.sqrt(2.0 / (fan + fan)))
    weight = jax.random.normal(kw, (n_out, n_in + 1, n_in + 1), jnp.float32) * std

    # f32 path, both biases
    out = biaffine(x, y, weight, bias_x=True, bias_y=True)
    jax.block_until_ready(out)
    ref = _biaffine_ref(x, y, weight, True, True)
    np.testing.assert_allclose(np.asarray(out), np.asarray(ref),
                               rtol=1e-4, atol=1e-4)

    # n_out == 1 fast path (reshape, no transpose) + bias_y=False branch
    w1 = weight[:1, :, :n_in]                 # (1, n_in+1, n_in)
    out1 = biaffine(x, y, w1, bias_x=True, bias_y=False)
    jax.block_until_ready(out1)
    ref1 = _biaffine_ref(x, y, w1, True, False)
    np.testing.assert_allclose(np.asarray(out1), np.asarray(ref1),
                               rtol=1e-4, atol=1e-4)

    # bf16 MXU-operand path (memory-bound configs), f32 accumulation
    out_bf = biaffine(x, y, weight, bias_x=True, bias_y=True,
                      compute_dtype=jnp.bfloat16)
    jax.block_until_ready(out_bf)
    np.testing.assert_allclose(np.asarray(out_bf), np.asarray(ref),
                               rtol=1e-1, atol=2e-1)

    print("KERNEL_OK")
</pallas_src>

<mosaic_0001>
module attributes {stable_mosaic.version = 11 : i64} {
  func.func @_biaffine_kernel(%arg0: i32, %arg1: i32, %arg2: i32, %arg3: memref<2x8x128xf32, #tpu.memory_space<vmem>>, %arg4: memref<2x128x128xf32, #tpu.memory_space<vmem>>, %arg5: memref<1x128x128xf32, #tpu.memory_space<vmem>>, %arg6: memref<1x2x128xf32, #tpu.memory_space<vmem>>, %arg7: memref<2xf32, #tpu.memory_space<smem>>, %arg8: memref<2x1x8x128xf32, #tpu.memory_space<vmem>>) attributes {dimension_semantics = [#tpu.dimension_semantics<parallel>, #tpu.dimension_semantics<parallel>, #tpu.dimension_semantics<arbitrary>], iteration_bounds = array<i64: 1, 1, 2>, scalar_prefetch = 0 : i64, scratch_operands = 0 : i64, tpu.core_type = #tpu.core_type<tc>, window_params = [{transform_indices = @transform_0, window_bounds = array<i64: 2, 8, 128>}, {transform_indices = @transform_1, window_bounds = array<i64: 2, 128, 128>}, {transform_indices = @transform_2, window_bounds = array<i64: 1, 128, 128>}, {transform_indices = @transform_3, window_bounds = array<i64: 1, 2, 128>}, {transform_indices = @transform_4, window_bounds = array<i64: 2>}, {transform_indices = @transform_5, window_bounds = array<i64: 2, 1, 8, 128>}]} {
    %c0 = arith.constant 0 : index
    %c0_0 = arith.constant 0 : index
    %c0_1 = arith.constant 0 : index
    %0 = vector.load %arg3[%c0, %c0_0, %c0_1] : memref<2x8x128xf32, #tpu.memory_space<vmem>>, vector<2x8x128xf32>
    %1 = vector.shape_cast %0 : vector<2x8x128xf32> to vector<16x128xf32>
    %c0_2 = arith.constant 0 : index
    %c0_3 = arith.constant 0 : index
    %c0_4 = arith.constant 0 : index
    %2 = vector.load %arg5[%c0_2, %c0_3, %c0_4] : memref<1x128x128xf32, #tpu.memory_space<vmem>>, vector<1x128x128xf32>
    %3 = vector.shape_cast %2 : vector<1x128x128xf32> to vector<128x128xf32>
    %cst = arith.constant dense<0.000000e+00> : vector<16x128xf32>
    %4 = tpu.matmul %1, %3, %cst {dimension_numbers = #tpu.dot_dimension_numbers<[1], [0], [0], [1], [0, 0, 1, 1], [], []>} : vector<16x128xf32>, vector<128x128xf32>, vector<16x128xf32> -> vector<16x128xf32>
    %c0_5 = arith.constant 0 : index
    %c0_6 = arith.constant 0 : index
    %c0_7 = arith.constant 0 : index
    %5 = vector.load %arg6[%c0_5, %c0_6, %c0_7] : memref<1x2x128xf32, #tpu.memory_space<vmem>>, vector<1x1x128xf32>
    %6 = vector.shape_cast %5 : vector<1x1x128xf32> to vector<1x128xf32>
    %7 = vector.broadcast %6 : vector<1x128xf32> to vector<16x128xf32>
    %8 = arith.addf %4, %7 : vector<16x128xf32>
    %9 = vector.shape_cast %8 : vector<16x128xf32> to vector<2x8x128xf32>
    %c0_8 = arith.constant 0 : index
    %c0_9 = arith.constant 0 : index
    %c0_10 = arith.constant 0 : index
    %10 = vector.load %arg4[%c0_8, %c0_9, %c0_10] : memref<2x128x128xf32, #tpu.memory_space<vmem>>, vector<2x128x128xf32>
    %cst_11 = arith.constant dense<0.000000e+00> : vector<2x8x128xf32>
    %11 = tpu.matmul %9, %10, %cst_11 {dimension_numbers = #tpu.dot_dimension_numbers<[2], [2], [1], [1], [0, 0, 0, 1, 1, 1], [0], [0]>} : vector<2x8x128xf32>, vector<2x128x128xf32>, vector<2x8x128xf32> -> vector<2x8x128xf32>
    %c0_12 = arith.constant 0 : index
    %c1 = arith.constant 1 : index
    %c0_13 = arith.constant 0 : index
    %12 = vector.load %arg6[%c0_12, %c1, %c0_13] : memref<1x2x128xf32, #tpu.memory_space<vmem>>, vector<1x1x128xf32>
    %13 = vector.shape_cast %12 : vector<1x1x128xf32> to vector<1x128xf32>
    %c0_14 = arith.constant 0 : index
    %c0_15 = arith.constant 0 : index
    %c0_16 = arith.constant 0 : index
    %14 = vector.load %arg3[%c0_14, %c0_15, %c0_16] : memref<2x8x128xf32, #tpu.memory_space<vmem>>, vector<2x8x128xf32>
    %15 = vector.shape_cast %13 : vector<1x128xf32> to vector<1x1x128xf32>
    %16 = vector.broadcast %15 : vector<1x1x128xf32> to vector<2x8x128xf32>
    %17 = arith.mulf %14, %16 : vector<2x8x128xf32>
    %cst_17 = arith.constant dense<0.000000e+00> : vector<2x8xf32>
    %18 = vector.multi_reduction <add>, %17, %cst_17 [2] : vector<2x8x128xf32> to vector<2x8xf32>
    %19 = vector.shape_cast %18 : vector<2x8xf32> to vector<2x8x1xf32>
    %20 = arith.index_cast %arg2 : i32 to index
    %21 = memref.load %arg7[%20] : memref<2xf32, #tpu.memory_space<smem>>
    %22 = vector.broadcast %21 : f32 to vector<2x8x1xf32>
    %23 = arith.addf %19, %22 : vector<2x8x1xf32>
    %24 = vector.broadcast %23 : vector<2x8x1xf32> to vector<2x8x128xf32>
    %25 = arith.addf %11, %24 : vector<2x8x128xf32>
    %26 = vector.shape_cast %25 : vector<2x8x128xf32> to vector<2x1x8x128xf32>
    %c0_18 = arith.constant 0 : index
    %c0_19 = arith.constant 0 : index
    %c0_20 = arith.constant 0 : index
    %c0_21 = arith.constant 0 : index
    %27 = vector.load %arg8[%c0_18, %c0_19, %c0_20, %c0_21] : memref<2x1x8x128xf32, #tpu.memory_space<vmem>>, vector<2x1x8x128xf32>
    tpu.vector_store %arg8[%c0_18, %c0_19, %c0_20, %c0_21], %26 {strides = array<i32>} : memref<2x1x8x128xf32, #tpu.memory_space<vmem>>, vector<2x1x8x128xf32>,
    return
  }
  func.func @transform_0(%arg0: i32, %arg1: i32, %arg2: i32) -> (i32, i32, i32) {
    %c0_i32 = arith.constant 0 : i32
    %c0_i32_0 = arith.constant 0 : i32
    return %arg0, %arg1, %c0_i32 : i32, i32, i32
  }
  func.func @transform_1(%arg0: i32, %arg1: i32, %arg2: i32) -> (i32, i32, i32) {
    %c0_i32 = arith.constant 0 : i32
    %c0_i32_0 = arith.constant 0 : i32
    %c0_i32_1 = arith.constant 0 : i32
    return %arg0, %c0_i32, %c0_i32_0 : i32, i32, i32
  }
  func.func @transform_2(%arg0: i32, %arg1: i32, %arg2: i32) -> (i32, i32, i32) {
    %c0_i32 = arith.constant 0 : i32
    %c0_i32_0 = arith.constant 0 : i32
    %c0_i32_1 = arith.constant 0 : i32
    return %arg2, %c0_i32, %c0_i32_0 : i32, i32, i32
  }
  func.func @transform_3(%arg0: i32, %arg1: i32, %arg2: i32) -> (i32, i32, i32) {
    %c0_i32 = arith.constant 0 : i32
    %c0_i32_0 = arith.constant 0 : i32
    %c0_i32_1 = arith.constant 0 : i32
    return %arg2, %c0_i32, %c0_i32_0 : i32, i32, i32
  }
  func.func @transform_4(%arg0: i32, %arg1: i32, %arg2: i32) -> i32 {
    %c0_i32 = arith.constant 0 : i32
    %c0_i32_0 = arith.constant 0 : i32
    return %c0_i32 : i32
  }
  func.func @transform_5(%arg0: i32, %arg1: i32, %arg2: i32) -> (i32, i32, i32, i32) {
    %c0_i32 = arith.constant 0 : i32
    %c0_i32_0 = arith.constant 0 : i32
    return %arg0, %arg2, %arg1, %c0_i32 : i32, i32, i32, i32
  }
}

</mosaic_0001>

<llo_original>
// kernel: tpu_custom_call.1
$region0: #{tpu_custom_call.1}
  #allocation0 [shape = 'u32[]', space=smem, size = 0x4, offset = 0x4, fixed_abs, tag = 'smem constant byte address 0x4 - core index']
  #allocation1 [shape = 'u32[144,128]{1,0:T(1,128)}', space=vmem, size = 0x12000, scoped, tag = 'internal scratch']
  %s0 = inlined_call_operand.hbm [shape: f32[2,8,128], index: 0, kind: input, shape index: {}]
  %s1 = inlined_call_operand.hbm [shape: f32[2,128,128], index: 1, kind: input, shape index: {}]
  %s2 = inlined_call_operand.hbm [shape: f32[2,128,128], index: 2, kind: input, shape index: {}]
  %s3 = inlined_call_operand.vmem [shape: f32[2,2,128], index: 3, kind: input, shape index: {}]
  %s4 = inlined_call_operand.vmem [shape: f32[2], index: 4, kind: input, shape index: {}]
  %s5 = inlined_call_operand.hbm [shape: f32[2,2,8,128], index: 5, kind: output, shape index: {}]
  %s6 = sld [smem:[#allocation0]]
  $region69: #{tpu_custom_call.1} parent=0
    _
  %s8 = ssub.s32 1, %s6
  %s9 = scalar_select 0, %s8, %s6
  $region1: #{tpu_custom_call.1} parent=0
    #allocation2 [shape = 'u8[8192]{0}', space=vmem, size = 0x2000, scoped, tag = 'input window, operand 0, single buffered']
    #allocation3 [shape = 's32[2]{0}', space=sflag, size = 0x8, scoped, tag = 'scoped memory for tpu_custom_call.1']
    #allocation4 [shape = 's32[2]{0}', space=sflag, size = 0x8, scoped, tag = 'scoped memory for tpu_custom_call.1']
    #allocation5 [shape = 's32[2]{0}', space=sflag, size = 0x8, scoped, tag = 'scoped memory for tpu_custom_call.1']
    #allocation6 [shape = 'u8[131072]{0}', space=vmem, size = 0x20000, scoped, tag = 'input window, operand 1, single buffered']
    #allocation7 [shape = 's32[1]{0}', space=sflag, size = 0x4, scoped, tag = 'scoped memory for tpu_custom_call.1']
    #allocation8 [shape = 'u8[131072]{0}', space=vmem, size = 0x20000, scoped, tag = 'input window, operand 2']
    #allocation9 [shape = 'u8[512]{0}', space=smem, size = 0x200, scoped, tag = 'input window, operand 4, single buffered']
    #allocation10 [shape = 'u8[16384]{0}', space=vmem, size = 0x4000, scoped, tag = 'output window, operand 0']
    %10 = vsyncpa [#allocation3], 0
    %11 = vsyncpa [#allocation7], 0
    %12 = vsyncpa [#allocation5], 0
    %13 = vsyncpa [#allocation4], 0
    %s14 = scalar_lea.sflag [#allocation4], 1
    %15 = vsyncpa %s14, 0
    loop: start=0, step=1, limit=4
    $region2: #{tpu_custom_call.1} parent=1 // loop_pre_header
      _
    $region3: #{tpu_custom_call.1} parent=1 // loop_header
      %s17 = sphi 0, %s21
      %p18 = scmp.ge.s32.totalorder %s17, 4
      %s24 = sphi 0, %s43
      %s25 = sphi 0, %s39
      %s26 = sphi 0, %s35
      %s27 = sphi 0, %s24
      %s28 = sphi 0, %s25
      %s29 = sphi 0, %s26
      %s30 = sphi 0, %s27
      %s31 = sphi 0, %s28
      %s32 = sphi 0, %s29
      %s48 = sphi 0, %s50
      %s51 = sphi 0, %s48
      %s52 = sphi 0, %s51
      %s68 = sphi 0, %s52
      %s74 = sphi 0, %s76
      %s77 = sphi 0, %s74
      %s78 = sphi 0, %s77
      %s94 = sphi 0, %s78
      %s100 = sphi 0, %s102
      %s103 = sphi 0, %s100
      %s104 = sphi 0, %s103
      %s120 = sphi 0, %s104
      %s126 = sphi 0, %s128
      %s129 = sphi 0, %s126
      %s130 = sphi 0, %s129
      %s146 = sphi 0, %s130
      %s150 = sphi 0, %s150
      %s152 = sphi 0, %s150
      %s153 = sphi 0, %s152
      %s167 = sphi 0, %s153
      %s177 = sphi 0, %s179
      %s180 = sphi 0, %s177
      %s181 = sphi 0, %s180
      %s197 = sphi 0, %s181
    $region4: #{tpu_custom_call.1} parent=1 // loop_header_branch
      %20 = sbr.rel (%p18) target = $region8
    $region5: #{tpu_custom_call.1} parent=1 // loop_body
      %s22 = ssub.s32 %s17, 1
      %s23 = ssub.s32 %s17, 2
      %s33 = sadd.s32 1, %s26
      %p34 = scmp.ge.s32.totalorder %s33, 2
      %s35 = scalar_select %p34, 0, %s33
      %s36 = sadd.s32 1, %s25
      %s37 = scalar_select %p34, %s36, %s25
      %p38 = scmp.ge.s32.totalorder %s37, 1
      %s39 = scalar_select %p38, 0, %s37
      %s40 = sadd.s32 1, %s24
      %s41 = scalar_select %p38, %s40, %s24
      %p42 = scmp.ge.s32.totalorder %s41, 1
      %s43 = scalar_select %p42, 0, %s41
      %s44 = ssub.s32 %s24, %s43
      %s45 = ssub.s32 %s25, %s39
      %s46 = sor.u32 %s44, %s45
      %p47 = scmp.eq.s32.totalorder %s46, 0
      %s49 = sadd.s32 %s48, 1
      %s50 = scalar_select %p47, %s48, %s49
      %p53 = pneg %p47
      %p54 = scmp.eq.s32.totalorder %s17, 1
      %p55 = por %p53, %p54
      %p56 = scmp.ne.s32.totalorder %s48, %s51
      %p57 = scmp.eq.s32.totalorder %s17, 0
      %p58 = por %p56, %p57
      %p59 = scmp.ne.s32.totalorder %s48, %s51
      %p60 = scmp.eq.s32.totalorder %s22, 1
      %p61 = por %p59, %p60
      %p62 = scmp.ne.s32.totalorder %s51, %s52
      %p63 = scmp.eq.s32.totalorder %s22, 0
      %p64 = por %p62, %p63
      %p65 = scmp.ne.s32.totalorder %s51, %s52
      %p66 = scmp.eq.s32.totalorder %s23, 1
      %p67 = por %p65, %p66
      %p69 = scmp.ne.s32.totalorder %s52, %s68
      %p70 = scmp.eq.s32.totalorder %s23, 0
      %p71 = por %p69, %p70
      %s72 = ssub.s32 %s24, %s43
      %p73 = scmp.eq.s32.totalorder %s72, 0
      %s75 = sadd.s32 %s74, 1
      %s76 = scalar_select %p73, %s74, %s75
      %p79 = pneg %p73
      %p80 = scmp.eq.s32.totalorder %s17, 1
      %p81 = por %p79, %p80
      %p82 = scmp.ne.s32.totalorder %s74, %s77
      %p83 = scmp.eq.s32.totalorder %s17, 0
      %p84 = por %p82, %p83
      %p85 = scmp.ne.s32.totalorder %s74, %s77
      %p86 = scmp.eq.s32.totalorder %s22, 1
      %p87 = por %p85, %p86
      %p88 = scmp.ne.s32.totalorder %s77, %s78
      %p89 = scmp.eq.s32.totalorder %s22, 0
      %p90 = por %p88, %p89
      %p91 = scmp.ne.s32.totalorder %s77, %s78
      %p92 = scmp.eq.s32.totalorder %s23, 1
      %p93 = por %p91, %p92
      %p95 = scmp.ne.s32.totalorder %s78, %s94
      %p96 = scmp.eq.s32.totalorder %s23, 0
      %p97 = por %p95, %p96
      %s98 = ssub.s32 %s26, %s35
      %p99 = scmp.eq.s32.totalorder %s98, 0
      %s101 = sadd.s32 %s100, 1
      %s102 = scalar_select %p99, %s100, %s101
      %p105 = pneg %p99
      %p106 = scmp.eq.s32.totalorder %s17, 1
      %p107 = por %p105, %p106
      %p108 = scmp.ne.s32.totalorder %s100, %s103
      %p109 = scmp.eq.s32.totalorder %s17, 0
      %p110 = por %p108, %p109
      %p111 = scmp.ne.s32.totalorder %s100, %s103
      %p112 = scmp.eq.s32.totalorder %s22, 1
      %p113 = por %p111, %p112
      %p114 = scmp.ne.s32.totalorder %s103, %s104
      %p115 = scmp.eq.s32.totalorder %s22, 0
      %p116 = por %p114, %p115
      %p117 = scmp.ne.s32.totalorder %s103, %s104
      %p118 = scmp.eq.s32.totalorder %s23, 1
      %p119 = por %p117, %p118
      %p121 = scmp.ne.s32.totalorder %s104, %s120
      %p122 = scmp.eq.s32.totalorder %s23, 0
      %p123 = por %p121, %p122
      %s124 = ssub.s32 %s26, %s35
      %p125 = scmp.eq.s32.totalorder %s124, 0
      %s127 = sadd.s32 %s126, 1
      %s128 = scalar_select %p125, %s126, %s127
      %p131 = pneg %p125
      %p132 = scmp.eq.s32.totalorder %s17, 1
      %p133 = por %p131, %p132
      %p134 = scmp.ne.s32.totalorder %s126, %s129
      %p135 = scmp.eq.s32.totalorder %s17, 0
      %p136 = por %p134, %p135
      %p137 = scmp.ne.s32.totalorder %s126, %s129
      %p138 = scmp.eq.s32.totalorder %s22, 1
      %p139 = por %p137, %p138
      %p140 = scmp.ne.s32.totalorder %s129, %s130
      %p141 = scmp.eq.s32.totalorder %s22, 0
      %p142 = por %p140, %p141
      %p143 = scmp.ne.s32.totalorder %s129, %s130
      %p144 = scmp.eq.s32.totalorder %s23, 1
      %p145 = por %p143, %p144
      %p147 = scmp.ne.s32.totalorder %s130, %s146
      %p148 = scmp.eq.s32.totalorder %s23, 0
      %p149 = por %p147, %p148
      %s151 = sadd.s32 %s150, 1
      %p154 = scmp.eq.s32.totalorder %s17, 1
      %p155 = scmp.ne.s32.totalorder %s150, %s152
      %p156 = scmp.eq.s32.totalorder %s17, 0
      %p157 = por %p155, %p156
      %p158 = scmp.ne.s32.totalorder %s150, %s152
      %p159 = scmp.eq.s32.totalorder %s22, 1
      %p160 = por %p158, %p159
      %p161 = scmp.ne.s32.totalorder %s152, %s153
      %p162 = scmp.eq.s32.totalorder %s22, 0
      %p163 = por %p161, %p162
      %p164 = scmp.ne.s32.totalorder %s152, %s153
      %p165 = scmp.eq.s32.totalorder %s23, 1
      %p166 = por %p164, %p165
      %p168 = scmp.ne.s32.totalorder %s153, %s167
      %p169 = scmp.eq.s32.totalorder %s23, 0
      %p170 = por %p168, %p169
      %s171 = ssub.s32 %s24, %s43
      %s172 = ssub.s32 %s26, %s35
      %s173 = sor.u32 %s171, %s172
      %s174 = ssub.s32 %s25, %s39
      %s175 = sor.u32 %s173, %s174
      %p176 = scmp.eq.s32.totalorder %s175, 0
      %s178 = sadd.s32 %s177, 1
      %s179 = scalar_select %p176, %s177, %s178
      %p182 = pneg %p176
      %p183 = scmp.eq.s32.totalorder %s17, 1
      %p184 = por %p182, %p183
      %p185 = scmp.ne.s32.totalorder %s177, %s180
      %p186 = scmp.eq.s32.totalorder %s17, 0
      %p187 = por %p185, %p186
      %p188 = scmp.ne.s32.totalorder %s177, %s180
      %p189 = scmp.eq.s32.totalorder %s22, 1
      %p190 = por %p188, %p189
      %p191 = scmp.ne.s32.totalorder %s180, %s181
      %p192 = scmp.eq.s32.totalorder %s22, 0
      %p193 = por %p191, %p192
      %p194 = scmp.ne.s32.totalorder %s180, %s181
      %p195 = scmp.eq.s32.totalorder %s23, 1
      %p196 = por %p194, %p195
      %p198 = scmp.ne.s32.totalorder %s181, %s197
      %p199 = scmp.eq.s32.totalorder %s23, 0
      %p200 = por %p198, %p199
      %p201 = scmp.le.s32.totalorder 1, %s17
      %p202 = scmp.lt.s32.totalorder %s17, 3
      %p203 = pnand %p201, %p202
      %p204 = pneg %p203
      // Predicated region
      $region9: #{tpu_custom_call.1} parent=5 // pred_check
        _
      $region10: #{tpu_custom_call.1} parent=5 // pred_check_branch
        %206 = sbr.rel (%p203) target = $region12
      $region11: #{tpu_custom_call.1} parent=5 // pred_region
        %s207 = ssub.s32 %s17, 1
        // Predicated region
        $region13: #{tpu_custom_call.1} parent=11 // pred_check
          %p208 = pneg %p64
        $region14: #{tpu_custom_call.1} parent=11 // pred_check_branch
          %210 = sbr.rel (%p208) target = $region16
        $region15: #{tpu_custom_call.1} parent=11 // pred_region
          %s211 = smul.u32 2, %s27
          %s213 = ssub.s32 256, 256
          %214 = vsyncadd [#allocation3], %s213
          %s215 = sadd.s32 %s28, %s211
          %s216 = smul.addr %s215, 128
          %s217 = scalar_lea.hbm %s0, %s216
          %s218 = sshll.u32 [#allocation2], 4
          %s219 = int_to_ptr.vmem [resolvable:$true] %s218
          %224 = dma.hbm_to_vmem [thread:$0]  %s217, 256, %s219, [#allocation3], 128, 128, 8
        $region16: #{tpu_custom_call.1} parent=11 // pred_fallthru
          _
        // Predicated region
        $region17: #{tpu_custom_call.1} parent=11 // pred_check
          %p225 = pneg %p90
        $region18: #{tpu_custom_call.1} parent=11 // pred_check_branch
          %227 = sbr.rel (%p225) target = $region20
        $region19: #{tpu_custom_call.1} parent=11 // pred_region
          %s228 = smul.u32 2, %s27
          %s230 = ssub.s32 4096, 4096
          %231 = vsyncadd [#allocation7], %s230
          %s232 = smul.addr %s228, 16
          %s233 = smul.addr %s232, 128
          %s234 = scalar_lea.hbm %s1, %s233
          %s235 = sshll.u32 [#allocation6], 4
          %s236 = int_to_ptr.vmem [resolvable:$true] %s235
          %241 = dma.hbm_to_vmem [thread:$0]  %s234, 4096, %s236, [#allocation7], 128, 128, 8
        $region20: #{tpu_custom_call.1} parent=11 // pred_fallthru
          _
        // Predicated region
        $region21: #{tpu_custom_call.1} parent=11 // pred_check
          %p242 = pneg %p163
        $region22: #{tpu_custom_call.1} parent=11 // pred_check_branch
          %244 = sbr.rel (%p242) target = $region24
        $region23: #{tpu_custom_call.1} parent=11 // pred_region
          %s246 = ssub.s32 16, 16
          %247 = vsyncadd [#allocation5], %s246
          %s249 = sshll.u32 %s4, 4
          %s250 = int_to_ptr.vmem [resolvable:$true] %s249
          %252 = dma.vmem_to_smem %s250, 16, [#allocation9], [#allocation5]
        $region24: #{tpu_custom_call.1} parent=11 // pred_fallthru
          _
      $region12: #{tpu_custom_call.1} parent=5 // pred_fallthru
        _
      %p253 = scmp.lt.s32.totalorder %s17, 2
      // Predicated region
      $region25: #{tpu_custom_call.1} parent=5 // pred_check
        %p254 = pneg %p253
      $region26: #{tpu_custom_call.1} parent=5 // pred_check_branch
        %256 = sbr.rel (%p254) target = $region28
      $region27: #{tpu_custom_call.1} parent=5 // pred_region
        // Predicated region
        $region29: #{tpu_custom_call.1} parent=27 // pred_check
          %p257 = pneg %p110
        $region30: #{tpu_custom_call.1} parent=27 // pred_check_branch
          %259 = sbr.rel (%p257) target = $region32
        $region31: #{tpu_custom_call.1} parent=27 // pred_region
          %s260 = sand.u32 %s17, 1
          %s261 = scalar_lea.sflag [#allocation3], %s260
          %s262 = sand.u32 %s100, 1
          %s263 = smul.addr %s262, 128
          %s264 = scalar_lea.vmem [#allocation8], %s263
          %s266 = ssub.s32 2048, 2048
          %267 = vsyncadd %s261, %s266
          %s268 = smul.addr %s26, 16
          %s269 = smul.addr %s268, 128
          %s270 = scalar_lea.hbm %s2, %s269
          %s271 = sshll.u32 %s264, 4
          %s272 = int_to_ptr.vmem [resolvable:$true] %s271
          %277 = dma.hbm_to_vmem [thread:$0]  %s270, 2048, %s272, %s261, 128, 128, 8
        $region32: #{tpu_custom_call.1} parent=27 // pred_fallthru
          _
        // Predicated region
        $region33: #{tpu_custom_call.1} parent=27 // pred_check
          %p278 = pneg %p136
        $region34: #{tpu_custom_call.1} parent=27 // pred_check_branch
          %280 = sbr.rel (%p278) target = $region36
        $region35: #{tpu_custom_call.1} parent=27 // pred_region
          %p281 = scmp.lt.s32.totalorder %s26, 1
          %s282 = scalar_select %p281, %s26, 1
          %s283 = smul.addr %s282, 2
          %s284 = scalar_lea.vmem %s3, %s283
        $region36: #{tpu_custom_call.1} parent=27 // pred_fallthru
          _
      $region28: #{tpu_custom_call.1} parent=5 // pred_fallthru
        _
      %p285 = scmp.le.s32.totalorder 1, %s17
      %p286 = scmp.lt.s32.totalorder %s17, 3
      %p287 = pnand %p285, %p286
      %p288 = pneg %p287
      // Predicated region
      $region37: #{tpu_custom_call.1} parent=5 // pred_check
        _
      $region38: #{tpu_custom_call.1} parent=5 // pred_check_branch
        %290 = sbr.rel (%p287) target = $region40
      $region39: #{tpu_custom_call.1} parent=5 // pred_region
        %s291 = ssub.s32 %s17, 1
        // Predicated region
        $region41: #{tpu_custom_call.1} parent=39 // pred_check
          %p292 = pneg %p64
        $region42: #{tpu_custom_call.1} parent=39 // pred_check_branch
          %294 = sbr.rel (%p292) target = $region44
        $region43: #{tpu_custom_call.1} parent=39 // pred_region
          %295 = dma.done [#allocation3], 256
        $region44: #{tpu_custom_call.1} parent=39 // pred_fallthru
          _
        // Predicated region
        $region45: #{tpu_custom_call.1} parent=39 // pred_check
          %p296 = pneg %p90
        $region46: #{tpu_custom_call.1} parent=39 // pred_check_branch
          %298 = sbr.rel (%p296) target = $region48
        $region47: #{tpu_custom_call.1} parent=39 // pred_region
          %299 = dma.done [#allocation7], 4096
        $region48: #{tpu_custom_call.1} parent=39 // pred_fallthru
          _
        %s300 = sand.u32 %s22, 1
        %s301 = scalar_lea.sflag [#allocation3], %s300
        %s302 = sand.u32 %s103, 1
        %s303 = smul.addr %s302, 128
        %s304 = scalar_lea.vmem [#allocation8], %s303
        // Predicated region
        $region49: #{tpu_custom_call.1} parent=39 // pred_check
          %p305 = pneg %p116
        $region50: #{tpu_custom_call.1} parent=39 // pred_check_branch
          %307 = sbr.rel (%p305) target = $region52
        $region51: #{tpu_custom_call.1} parent=39 // pred_region
          %308 = dma.done %s301, 2048
        $region52: #{tpu_custom_call.1} parent=39 // pred_fallthru
          _
        // Predicated region
        $region53: #{tpu_custom_call.1} parent=39 // pred_check
          %p309 = pneg %p163
        $region54: #{tpu_custom_call.1} parent=39 // pred_check_branch
          %311 = sbr.rel (%p309) target = $region56
        $region55: #{tpu_custom_call.1} parent=39 // pred_region
          %312 = dma.done [#allocation5], 16
        $region56: #{tpu_custom_call.1} parent=39 // pred_fallthru
          _
        %313 = sfence
        %p314 = pneg %p64
        %p315 = pneg %p61
        %p316 = pneg %p90
        %p317 = pneg %p87
        %s318 = sand.u32 %s22, 1
        %s319 = scalar_lea.sflag [#allocation3], %s318
        %s320 = sand.u32 %s103, 1
        %s321 = smul.addr %s320, 128
        %s322 = scalar_lea.vmem [#allocation8], %s321
        %p323 = pneg %p116
        %p324 = pneg %p113
        %p325 = scmp.lt.s32.totalorder %s29, 1
        %s326 = scalar_select %p325, %s29, 1
        %s327 = smul.addr %s326, 2
        %s328 = scalar_lea.vmem %s3, %s327
        %p329 = pneg %p142
        %p330 = pneg %p139
        %p331 = pneg %p163
        %p332 = pneg %p160
        %p333 = pneg %p193
        %p334 = pneg %p190
        %s335 = sand.u32 %s180, 1
        %s336 = scalar_lea.sflag [#allocation4], %s335
        %s337 = sand.u32 %s180, 1
        %s338 = smul.addr %s337, 16
        %s339 = scalar_lea.vmem [#allocation10], %s338
        %s340 = smul.u32 2, %s27
        %s341 = smul.u32 2, %s27
        %p342 = scmp.lt.s32.totalorder %s29, 1
        %s343 = scalar_select %p342, %s29, 1
        %s344 = smul.addr %s343, 2
        %s345 = scalar_lea.vmem %s3, %s344
        %s346 = smul.u32 2, %s27
        %v347 = vld [vmem:[#allocation2] sm:$0xff]
        %v348 = vld [vmem:[#allocation2 + $0x8] sm:$0xff]
        %v349 = vld [vmem:[%s304] sm:$0xff]
        %v350 = vld [vmem:[%s304 + $0x8] sm:$0xff]
        %v351 = vld [vmem:[%s304 + $0x10] sm:$0xff]
        %v352 = vld [vmem:[%s304 + $0x18] sm:$0xff]
        %v353 = vld [vmem:[%s304 + $0x20] sm:$0xff]
        %v354 = vld [vmem:[%s304 + $0x28] sm:$0xff]
        %v355 = vld [vmem:[%s304 + $0x30] sm:$0xff]
        %v356 = vld [vmem:[%s304 + $0x38] sm:$0xff]
        %v357 = vld [vmem:[%s304 + $0x40] sm:$0xff]
        %v358 = vld [vmem:[%s304 + $0x48] sm:$0xff]
        %v359 = vld [vmem:[%s304 + $0x50] sm:$0xff]
        %v360 = vld [vmem:[%s304 + $0x58] sm:$0xff]
        %v361 = vld [vmem:[%s304 + $0x60] sm:$0xff]
        %v362 = vld [vmem:[%s304 + $0x68] sm:$0xff]
        %v363 = vld [vmem:[%s304 + $0x70] sm:$0xff]
        %v364 = vld [vmem:[%s304 + $0x78] sm:$0xff]
        %v365 = vld [vmem:[%s345] sm:$0x1]
        %v366 = vlaneseq
        %v367 = vshrl.u32 %v366, 7
        %v368 = vsub.s32 0, %v367
        %v369 = vrot.slane %v365, %v368
        %370 = vmatprep.subr.mxu0 0.0
        %371 = vmatpush1.msra.mxu0 %v349
        %372 = vmatprep.subr.mxu0 0.0
        %373 = vmatpush1.msra.mxu0 %v350
        %374 = vmatprep.subr.mxu0 0.0
        %375 = vmatpush1.msra.mxu0 %v351
        %376 = vmatprep.subr.mxu0 0.0
        %377 = vmatpush1.msra.mxu0 %v352
        %378 = vmatprep.subr.mxu0 0.0
        %379 = vmatpush1.msra.mxu0 %v353
        %380 = vmatprep.subr.mxu0 0.0
        %381 = vmatpush1.msra.mxu0 %v354
        %382 = vmatprep.subr.mxu0 0.0
        %383 = vmatpush1.msra.mxu0 %v355
        %384 = vmatprep.subr.mxu0 0.0
        %385 = vmatpush1.msra.mxu0 %v356
        %386 = vmatprep.subr.mxu0 0.0
        %387 = vmatpush1.msra.mxu0 %v357
        %388 = vmatprep.subr.mxu0 0.0
        %389 = vmatpush1.msra.mxu0 %v358
        %390 = vmatprep.subr.mxu0 0.0
        %391 = vmatpush1.msra.mxu0 %v359
        %392 = vmatprep.subr.mxu0 0.0
        %393 = vmatpush1.msra.mxu0 %v360
        %394 = vmatprep.subr.mxu0 0.0
        %395 = vmatpush1.msra.mxu0 %v361
        %396 = vmatprep.subr.mxu0 0.0
        %397 = vmatpush1.msra.mxu0 %v362
        %398 = vmatprep.subr.mxu0 0.0
        %399 = vmatpush1.msra.mxu0 %v363
        %400 = vmatprep.subr.mxu0 0.0
        %401 = vmatpush1.msra.mxu0 %v364
        %402 = vmatprep.subr.mxu0 0.0
        %403 = vmatpush1.msra.mxu0 0.0
        %404 = vmatprep.subr.mxu0 0.0
        %405 = vmatpush1.msra.mxu0 0.0
        %406 = vmatprep.subr.mxu0 0.0
        %407 = vmatpush1.msra.mxu0 0.0
        %408 = vmatprep.subr.mxu0 0.0
        %409 = vmatpush1.msra.mxu0 0.0
        %410 = vmatprep.subr.mxu0 0.0
        %411 = vmatpush1.msra.mxu0 0.0
        %412 = vmatprep.subr.mxu0 0.0
        %413 = vmatpush1.msra.mxu0 0.0
        %414 = vmatprep.subr.mxu0 0.0
        %415 = vmatpush1.msra.mxu0 0.0
        %416 = vmatprep.subr.mxu0 0.0
        %417 = vmatpush1.msra.mxu0 0.0
        %418 = vmatprep.subr.mxu0 0.0
        %419 = vmatpush1.msra.mxu0 0.0
        %420 = vmatprep.subr.mxu0 0.0
        %421 = vmatpush1.msra.mxu0 0.0
        %422 = vmatprep.subr.mxu0 0.0
        %423 = vmatpush1.msra.mxu0 0.0
        %424 = vmatprep.subr.mxu0 0.0
        %425 = vmatpush1.msra.mxu0 0.0
        %426 = vmatprep.subr.mxu0 0.0
        %427 = vmatpush1.msra.mxu0 0.0
        %428 = vmatprep.subr.mxu0 0.0
        %429 = vmatpush1.msra.mxu0 0.0
        %430 = vmatprep.subr.mxu0 0.0
        %431 = vmatpush1.msra.mxu0 0.0
        %432 = vmatprep.subr.mxu0 0.0
        %433 = vmatpush1.msra.mxu0 0.0
        %434 = vmatprep.mubr.f32.mxu0 0.0
        %435 = vmatmul.mubr.f32.gmra.mrb[0].mxu0 %v347
        %v436 = vpop.f32.mrb[0].mxu0
        %v437 = vadd.f32 %v369, %v436
        %v438 = vpop.f32.mrb[0].mxu0
        %439 = vmatprep.mubr.f32.mxu0 0.0
        %440 = vmatmul.mubr.f32.gmra.mrb[0].mxu0 %v348
        %v441 = vpop.f32.mrb[0].mxu0
        %v442 = vadd.f32 %v369, %v441
        %v443 = vpop.f32.mrb[0].mxu0
        %444 = vdwg.mxu0
        %v445 = vld [vmem:[#allocation6] sm:$0xff]
        %v446 = vld [vmem:[#allocation6 + $0x8] sm:$0xff]
        %v447 = vld [vmem:[#allocation6 + $0x10] sm:$0xff]
        %v448 = vld [vmem:[#allocation6 + $0x18] sm:$0xff]
        %v449 = vld [vmem:[#allocation6 + $0x20] sm:$0xff]
        %v450 = vld [vmem:[#allocation6 + $0x28] sm:$0xff]
        %v451 = vld [vmem:[#allocation6 + $0x30] sm:$0xff]
        %v452 = vld [vmem:[#allocation6 + $0x38] sm:$0xff]
        %v453 = vld [vmem:[#allocation6 + $0x40] sm:$0xff]
        %v454 = vld [vmem:[#allocation6 + $0x48] sm:$0xff]
        %v455 = vld [vmem:[#allocation6 + $0x50] sm:$0xff]
        %v456 = vld [vmem:[#allocation6 + $0x58] sm:$0xff]
        %v457 = vld [vmem:[#allocation6 + $0x60] sm:$0xff]
        %v458 = vld [vmem:[#allocation6 + $0x68] sm:$0xff]
        %v459 = vld [vmem:[#allocation6 + $0x70] sm:$0xff]
        %v460 = vld [vmem:[#allocation6 + $0x78] sm:$0xff]
        %v461 = vld [vmem:[#allocation6 + $0x80] sm:$0xff]
        %v462 = vld [vmem:[#allocation6 + $0x88] sm:$0xff]
        %v463 = vld [vmem:[#allocation6 + $0x90] sm:$0xff]
        %v464 = vld [vmem:[#allocation6 + $0x98] sm:$0xff]
        %v465 = vld [vmem:[#allocation6 + $0xa0] sm:$0xff]
        %v466 = vld [vmem:[#allocation6 + $0xa8] sm:$0xff]
        %v467 = vld [vmem:[#allocation6 + $0xb0] sm:$0xff]
        %v468 = vld [vmem:[#allocation6 + $0xb8] sm:$0xff]
        %v469 = vld [vmem:[#allocation6 + $0xc0] sm:$0xff]
        %v470 = vld [vmem:[#allocation6 + $0xc8] sm:$0xff]
        %v471 = vld [vmem:[#allocation6 + $0xd0] sm:$0xff]
        %v472 = vld [vmem:[#allocation6 + $0xd8] sm:$0xff]
        %v473 = vld [vmem:[#allocation6 + $0xe0] sm:$0xff]
        %v474 = vld [vmem:[#allocation6 + $0xe8] sm:$0xff]
        %v475 = vld [vmem:[#allocation6 + $0xf0] sm:$0xff]
        %v476 = vld [vmem:[#allocation6 + $0xf8] sm:$0xff]
        %v477 = vld [vmem:[%s345 + $0x1] sm:$0x1]
        %v478 = vlaneseq
        %v479 = vshrl.u32 %v478, 7
        %v480 = vsub.s32 0, %v479
        %v481 = vrot.slane %v477, %v480
        %v482 = vmul.f32 %v347, %v481
        %v483 = vmul.f32 %v348, %v481
        %484 = vadd.xlane.f32.xlu0 %v482
        %v485 = vpop.xlane.xlu0 %484
        %486 = vadd.xlane.f32.xlu0 %v483
        %v487 = vpop.xlane.xlu0 %486
        %s488 = sld [smem:[#allocation9 + %s29]]
        %v489 = vstv %s488
        %v490 = vadd.f32 %v485, %v489
        %v491 = vadd.f32 %v487, %v489
        %492 = vmatprep.subr.mxu0 0.0
        %493 = vmatpush1.xpose.msra.mxu0 %v445
        %494 = vmatprep.subr.mxu0 0.0
        %495 = vmatpush1.xpose.msra.mxu0 %v446
        %496 = vmatprep.subr.mxu0 0.0
        %497 = vmatpush1.xpose.msra.mxu0 %v447
        %498 = vmatprep.subr.mxu0 0.0
        %499 = vmatpush1.xpose.msra.mxu0 %v448
        %500 = vmatprep.subr.mxu0 0.0
        %501 = vmatpush1.xpose.msra.mxu0 %v449
        %502 = vmatprep.subr.mxu0 0.0
        %503 = vmatpush1.xpose.msra.mxu0 %v450
        %504 = vmatprep.subr.mxu0 0.0
        %505 = vmatpush1.xpose.msra.mxu0 %v451
        %506 = vmatprep.subr.mxu0 0.0
        %507 = vmatpush1.xpose.msra.mxu0 %v452
        %508 = vmatprep.subr.mxu0 0.0
        %509 = vmatpush1.xpose.msra.mxu0 %v453
        %510 = vmatprep.subr.mxu0 0.0
        %511 = vmatpush1.xpose.msra.mxu0 %v454
        %512 = vmatprep.subr.mxu0 0.0
        %513 = vmatpush1.xpose.msra.mxu0 %v455
        %514 = vmatprep.subr.mxu0 0.0
        %515 = vmatpush1.xpose.msra.mxu0 %v456
        %516 = vmatprep.subr.mxu0 0.0
        %517 = vmatpush1.xpose.msra.mxu0 %v457
        %518 = vmatprep.subr.mxu0 0.0
        %519 = vmatpush1.xpose.msra.mxu0 %v458
        %520 = vmatprep.subr.mxu0 0.0
        %521 = vmatpush1.xpose.msra.mxu0 %v459
        %522 = vmatprep.subr.mxu0 0.0
        %523 = vmatpush1.xpose.msra.mxu0 %v460
        %524 = vmatprep.subr.mxu0 0.0
        %525 = vmatpush1.xpose.msra.mxu0 0.0
        %526 = vmatprep.subr.mxu0 0.0
        %527 = vmatpush1.xpose.msra.mxu0 0.0
        %528 = vmatprep.subr.mxu0 0.0
        %529 = vmatpush1.xpose.msra.mxu0 0.0
        %530 = vmatprep.subr.mxu0 0.0
        %531 = vmatpush1.xpose.msra.mxu0 0.0
        %532 = vmatprep.subr.mxu0 0.0
        %533 = vmatpush1.xpose.msra.mxu0 0.0
        %534 = vmatprep.subr.mxu0 0.0
        %535 = vmatpush1.xpose.msra.mxu0 0.0
        %536 = vmatprep.subr.mxu0 0.0
        %537 = vmatpush1.xpose.msra.mxu0 0.0
        %538 = vmatprep.subr.mxu0 0.0
        %539 = vmatpush1.xpose.msra.mxu0 0.0
        %540 = vmatprep.subr.mxu0 0.0
        %541 = vmatpush1.xpose.msra.mxu0 0.0
        %542 = vmatprep.subr.mxu0 0.0
        %543 = vmatpush1.xpose.msra.mxu0 0.0
        %544 = vmatprep.subr.mxu0 0.0
        %545 = vmatpush1.xpose.msra.mxu0 0.0
        %546 = vmatprep.subr.mxu0 0.0
        %547 = vmatpush1.xpose.msra.mxu0 0.0
        %548 = vmatprep.subr.mxu0 0.0
        %549 = vmatpush1.xpose.msra.mxu0 0.0
        %550 = vmatprep.subr.mxu0 0.0
        %551 = vmatpush1.xpose.msra.mxu0 0.0
        %552 = vmatprep.subr.mxu0 0.0
        %553 = vmatpush1.xpose.msra.mxu0 0.0
        %554 = vmatprep.subr.mxu0 0.0
        %555 = vmatpush1.xpose.msra.mxu0 0.0
        %556 = vmatprep.mubr.f32.mxu0 0.0
        %557 = vmatmul.mubr.f32.gmra.mrb[0].mxu0 %v437
        %v558 = vpop.f32.mrb[0].mxu0
        %v559 = vadd.f32 %v490, %v558
        %v560 = vpop.f32.mrb[0].mxu0
        %561 = vdwg.mxu0
        %562 = vmatprep.subr.mxu0 0.0
        %563 = vmatpush1.xpose.msra.mxu0 %v461
        %564 = vmatprep.subr.mxu0 0.0
        %565 = vmatpush1.xpose.msra.mxu0 %v462
        %566 = vmatprep.subr.mxu0 0.0
        %567 = vmatpush1.xpose.msra.mxu0 %v463
        %568 = vmatprep.subr.mxu0 0.0
        %569 = vmatpush1.xpose.msra.mxu0 %v464
        %570 = vmatprep.subr.mxu0 0.0
        %571 = vmatpush1.xpose.msra.mxu0 %v465
        %572 = vmatprep.subr.mxu0 0.0
        %573 = vmatpush1.xpose.msra.mxu0 %v466
        %574 = vmatprep.subr.mxu0 0.0
        %575 = vmatpush1.xpose.msra.mxu0 %v467
        %576 = vmatprep.subr.mxu0 0.0
        %577 = vmatpush1.xpose.msra.mxu0 %v468
        %578 = vmatprep.subr.mxu0 0.0
        %579 = vmatpush1.xpose.msra.mxu0 %v469
        %580 = vmatprep.subr.mxu0 0.0
        %581 = vmatpush1.xpose.msra.mxu0 %v470
        %582 = vmatprep.subr.mxu0 0.0
        %583 = vmatpush1.xpose.msra.mxu0 %v471
        %584 = vmatprep.subr.mxu0 0.0
        %585 = vmatpush1.xpose.msra.mxu0 %v472
        %586 = vmatprep.subr.mxu0 0.0
        %587 = vmatpush1.xpose.msra.mxu0 %v473
        %588 = vmatprep.subr.mxu0 0.0
        %589 = vmatpush1.xpose.msra.mxu0 %v474
        %590 = vmatprep.subr.mxu0 0.0
        %591 = vmatpush1.xpose.msra.mxu0 %v475
        %592 = vmatprep.subr.mxu0 0.0
        %593 = vmatpush1.xpose.msra.mxu0 %v476
        %594 = vmatprep.subr.mxu0 0.0
        %595 = vmatpush1.xpose.msra.mxu0 0.0
        %596 = vmatprep.subr.mxu0 0.0
        %597 = vmatpush1.xpose.msra.mxu0 0.0
        %598 = vmatprep.subr.mxu0 0.0
        %599 = vmatpush1.xpose.msra.mxu0 0.0
        %600 = vmatprep.subr.mxu0 0.0
        %601 = vmatpush1.xpose.msra.mxu0 0.0
        %602 = vmatprep.subr.mxu0 0.0
        %603 = vmatpush1.xpose.msra.mxu0 0.0
        %604 = vmatprep.subr.mxu0 0.0
        %605 = vmatpush1.xpose.msra.mxu0 0.0
        %606 = vmatprep.subr.mxu0 0.0
        %607 = vmatpush1.xpose.msra.mxu0 0.0
        %608 = vmatprep.subr.mxu0 0.0
        %609 = vmatpush1.xpose.msra.mxu0 0.0
        %610 = vmatprep.subr.mxu0 0.0
        %611 = vmatpush1.xpose.msra.mxu0 0.0
        %612 = vmatprep.subr.mxu0 0.0
        %613 = vmatpush1.xpose.msra.mxu0 0.0
        %614 = vmatprep.subr.mxu0 0.0
        %615 = vmatpush1.xpose.msra.mxu0 0.0
        %616 = vmatprep.subr.mxu0 0.0
        %617 = vmatpush1.xpose.msra.mxu0 0.0
        %618 = vmatprep.subr.mxu0 0.0
        %619 = vmatpush1.xpose.msra.mxu0 0.0
        %620 = vmatprep.subr.mxu0 0.0
        %621 = vmatpush1.xpose.msra.mxu0 0.0
        %622 = vmatprep.subr.mxu0 0.0
        %623 = vmatpush1.xpose.msra.mxu0 0.0
        %624 = vmatprep.subr.mxu0 0.0
        %625 = vmatpush1.xpose.msra.mxu0 0.0
        %626 = vmatprep.mubr.f32.mxu0 0.0
        %627 = vmatmul.mubr.f32.gmra.mrb[0].mxu0 %v442
        %v628 = vpop.f32.mrb[0].mxu0
        %v629 = vadd.f32 %v491, %v628
        %v630 = vpop.f32.mrb[0].mxu0
        %631 = vdwg.mxu0
        %632 = vst [vmem:[%s339] sm:$0xff] %v559
        %633 = vst [vmem:[%s339 + $0x8] sm:$0xff] %v629
        %s634 = sand.u32 %s180, 1
        %s635 = scalar_lea.sflag [#allocation4], %s634
        %s636 = sand.u32 %s180, 1
        %s637 = smul.addr %s636, 16
        %s638 = scalar_lea.vmem [#allocation10], %s637
        // Predicated region
        $region57: #{tpu_custom_call.1} parent=39 // pred_check
          %p639 = pneg %p190
        $region58: #{tpu_custom_call.1} parent=39 // pred_check_branch
          %641 = sbr.rel (%p639) target = $region60
        $region59: #{tpu_custom_call.1} parent=39 // pred_region
          %s642 = smul.u32 2, %s27
          %s644 = ssub.s32 256, 256
          %645 = vsyncadd %s635, %s644
          %s646 = sadd.s32 %s28, %s29
          %s647 = smul.addr %s642, 2
          %s648 = sadd.s32 %s646, %s647
          %s649 = smul.addr %s648, 128
          %s650 = scalar_lea.hbm %s5, %s649
          %s651 = sshll.u32 %s638, 4
          %s652 = int_to_ptr.vmem [resolvable:$true] %s651
          %657 = dma.vmem_to_hbm [thread:$0]  %s652, 256, %s650, %s635, 128, 256, 8
        $region60: #{tpu_custom_call.1} parent=39 // pred_fallthru
          _
      $region40: #{tpu_custom_call.1} parent=5 // pred_fallthru
        _
      %p658 = scmp.le.s32.totalorder 2, %s17
      // Predicated region
      $region61: #{tpu_custom_call.1} parent=5 // pred_check
        %p659 = pneg %p658
      $region62: #{tpu_custom_call.1} parent=5 // pred_check_branch
        %661 = sbr.rel (%p659) target = $region64
      $region63: #{tpu_custom_call.1} parent=5 // pred_region
        %s662 = ssub.s32 %s17, 2
        // Predicated region
        $region65: #{tpu_custom_call.1} parent=63 // pred_check
          %p663 = pneg %p196
        $region66: #{tpu_custom_call.1} parent=63 // pred_check_branch
          %665 = sbr.rel (%p663) target = $region68
        $region67: #{tpu_custom_call.1} parent=63 // pred_region
          %s666 = sand.u32 %s181, 1
          %s667 = scalar_lea.sflag [#allocation4], %s666
          %s668 = sand.u32 %s181, 1
          %s669 = smul.addr %s668, 16
          %s670 = scalar_lea.vmem [#allocation10], %s669
          %671 = dma.done %s667, 256
        $region68: #{tpu_custom_call.1} parent=63 // pred_fallthru
          _
      $region64: #{tpu_custom_call.1} parent=5 // pred_fallthru
        _
    $region6: #{tpu_custom_call.1} parent=1 // loop_footer
      %s21 = sadd.s32 1, %s17
    $region7: #{tpu_custom_call.1} parent=1 // loop_footer_branch
      %16 = sbr.rel target = $region3
    $region8: #{tpu_custom_call.1} parent=1 // loop_exit
      _
    %672 = vsyncpa [#allocation3], 1
    %s673 = scalar_lea.sflag [#allocation3], 1
    %674 = vsyncpa %s673, 1
    %675 = vsyncpa [#allocation7], 1
    %676 = vsyncpa [#allocation4], 1
    %s677 = scalar_lea.sflag [#allocation4], 1
    %678 = vsyncpa %s677, 1
    %679 = vsyncpa [#allocation5], 1
    %s680 = scalar_lea.sflag [#allocation5], 1
    %681 = vsyncpa %s680, 1

</llo_original>
